<compile_context>
chip_gen: v7x
topology: tpu7x:2x2x1
jax: 0.10.0
libtpu: 0.0.40
codegen_flags: <defaults>
</compile_context>

<pallas_src>
import jax
import jax.numpy as jnp
from jax import lax
from jax.experimental import pallas as pl
from jax.experimental.pallas import tpu as pltpu


def lstm_kernel(x_ref, wih_ref, whh_ref, b_ref, wout_ref, bout_ref,
                out_ref, hs_scr):
    """Gate layout along the 4H axis is [i, f, o, g] (pre-permuted in the wrapper)."""
    T = x_ref.shape[0]
    H = wout_ref.shape[0]

    # (1) Hoisted input projection: one (T, 4H) MXU matmul + one bias add,
    #     entirely off the serial recurrence chain.
    gates_x = jnp.dot(x_ref[...], wih_ref[...],
                      preferred_element_type=jnp.float32) + b_ref[...]     # (T, 4H)
    whh = whh_ref[...]                                                     # (H, 4H), loaded once

    # (2) Recurrent state lives in vregs (loop-carried values), not VMEM scratch.
    h = jnp.zeros((1, H), jnp.float32)
    c = jnp.zeros((1, H), jnp.float32)

    # (3) Fully unrolled time loop — T is a compile-time constant (small) so a
    #     static Python loop gives the scheduler full cross-iteration visibility.
    for t in range(T):
        gates = gates_x[t:t + 1, :] + jnp.dot(h, whh,
                                              preferred_element_type=jnp.float32)  # (1, 4H)
        # (5) Contiguous activations: sigmoid over [i|f|o], tanh over [g].
        sig = jax.nn.sigmoid(gates[:, :3 * H])
        i_g = sig[:, 0 * H:1 * H]
        f_g = sig[:, 1 * H:2 * H]
        o_g = sig[:, 2 * H:3 * H]
        g_g = jnp.tanh(gates[:, 3 * H:4 * H])
        c = f_g * c + i_g * g_g
        h = o_g * jnp.tanh(c)
        # (4) Stash h_t for the deferred output projection (not on the dep chain).
        hs_scr[t:t + 1, :] = h

    # (4) Deferred output projection: one (T, H) @ (H, 1) matmul + a single store.
    out_ref[...] = jnp.dot(hs_scr[...], wout_ref[...],
                           preferred_element_type=jnp.float32) + bout_ref[...]


def lstm_pred2_forward(seq, params):
    """seq: (T, input_size) float32. Returns (T, 1) float32."""
    w_ih_t, w_hh_t, b, w_out_t, b_out = params
    T = seq.shape[0]
    H = w_hh_t.shape[0]
    x = seq.reshape(T, -1).astype(jnp.float32)

    # Permute the 4H gate axis from PyTorch's [i, f, g, o] to [i, f, o, g] so the
    # kernel can apply sigmoid to one contiguous 3H block. Static slices, done once
    # outside the kernel (free weight plumbing).
    def perm(m):
        return jnp.concatenate([m[:, :2 * H], m[:, 3 * H:4 * H], m[:, 2 * H:3 * H]],
                               axis=1)

    w_ih_p = perm(w_ih_t)
    w_hh_p = perm(w_hh_t)
    b_p = perm(b)

    return pl.pallas_call(
        lstm_kernel,
        out_shape=jax.ShapeDtypeStruct((T, 1), jnp.float32),
        in_specs=[pl.BlockSpec(memory_space=pltpu.MemorySpace.VMEM)] * 6,
        out_specs=pl.BlockSpec(memory_space=pltpu.MemorySpace.VMEM),
        scratch_shapes=[pltpu.VMEM((T, H), jnp.float32)],   # all h_t rows
    )(x, w_ih_p, w_hh_p, b_p, w_out_t, b_out)


def lstm_pred2_reference(seq, params):
    """Pure-JAX reference matching torch.nn.LSTM + Linear semantics (PyTorch gate order)."""
    w_ih_t, w_hh_t, b, w_out_t, b_out = params
    T = seq.shape[0]
    H = w_hh_t.shape[0]
    x = seq.reshape(T, -1).astype(jnp.float32)

    def step(carry, x_t):
        h, c = carry
        gates = x_t[None, :] @ w_ih_t + h @ w_hh_t + b
        i = jax.nn.sigmoid(gates[:, 0 * H:1 * H])
        f = jax.nn.sigmoid(gates[:, 1 * H:2 * H])
        g = jnp.tanh(gates[:, 2 * H:3 * H])
        o = jax.nn.sigmoid(gates[:, 3 * H:4 * H])
        c = f * c + i * g
        h = o * jnp.tanh(c)
        return (h, c), h[0]

    h0 = jnp.zeros((1, H), jnp.float32)
    c0 = jnp.zeros((1, H), jnp.float32)
    (_, _), hs = lax.scan(step, (h0, c0), x)
    return hs @ w_out_t + b_out


def init_params(key, input_size, hidden_dim):
    """Deterministic init mimicking PyTorch's U(-1/sqrt(H), 1/sqrt(H)); PyTorch gate order."""
    k = 1.0 / jnp.sqrt(jnp.float32(hidden_dim))
    keys = jax.random.split(key, 6)
    # PyTorch stores (4H, I) / (4H, H); pre-transpose to (I, 4H) / (H, 4H).
    w_ih = jax.random.uniform(keys[0], (4 * hidden_dim, input_size), jnp.float32, -k, k)
    w_hh = jax.random.uniform(keys[1], (4 * hidden_dim, hidden_dim), jnp.float32, -k, k)
    b_ih = jax.random.uniform(keys[2], (4 * hidden_dim,), jnp.float32, -k, k)
    b_hh = jax.random.uniform(keys[3], (4 * hidden_dim,), jnp.float32, -k, k)
    w_out = jax.random.uniform(keys[4], (1, hidden_dim), jnp.float32, -k, k)
    b_out = jax.random.uniform(keys[5], (1,), jnp.float32, -k, k)
    return (w_ih.T,                     # (I, 4H)
            w_hh.T,                     # (H, 4H)
            (b_ih + b_hh)[None, :],     # (1, 4H)
            w_out.T,                    # (H, 1)
            b_out[None, :])             # (1, 1)


if __name__ == "__main__":
    input_size = 4
    hidden_dim = 32
    T = 8

    key = jax.random.PRNGKey(0)
    k_param, k_seq = jax.random.split(key)
    params = init_params(k_param, input_size, hidden_dim)
    seq = jax.random.normal(k_seq, (T, input_size), jnp.float32)

    out = jax.block_until_ready(lstm_pred2_forward(seq, params))
    ref = jax.block_until_ready(lstm_pred2_reference(seq, params))

    assert out.shape == (T, 1)
    assert jnp.allclose(out, ref, atol=1e-5, rtol=1e-5), (out, ref)
    print("KERNEL_OK")
</pallas_src>

<mosaic_0001>
module attributes {stable_mosaic.version = 11 : i64} {
  func.func @lstm_kernel(%arg0: memref<8x4xf32, #tpu.memory_space<vmem>>, %arg1: memref<4x128xf32, #tpu.memory_space<vmem>>, %arg2: memref<32x128xf32, #tpu.memory_space<vmem>>, %arg3: memref<1x128xf32, #tpu.memory_space<vmem>>, %arg4: memref<32x1xf32, #tpu.memory_space<vmem>>, %arg5: memref<1x1xf32, #tpu.memory_space<vmem>>, %arg6: memref<8x1xf32, #tpu.memory_space<vmem>>, %arg7: memref<8x32xf32, #tpu.memory_space<vmem>>) attributes {dimension_semantics = [], scalar_prefetch = 0 : i64, scratch_operands = 1 : i64, tpu.core_type = #tpu.core_type<tc>} {
    %c0 = arith.constant 0 : index
    %c0_0 = arith.constant 0 : index
    %0 = vector.load %arg0[%c0, %c0_0] : memref<8x4xf32, #tpu.memory_space<vmem>>, vector<8x4xf32>
    %c0_1 = arith.constant 0 : index
    %c0_2 = arith.constant 0 : index
    %1 = vector.load %arg1[%c0_1, %c0_2] : memref<4x128xf32, #tpu.memory_space<vmem>>, vector<4x128xf32>
    %cst = arith.constant dense<0.000000e+00> : vector<8x128xf32>
    %2 = tpu.matmul %0, %1, %cst {dimension_numbers = #tpu.dot_dimension_numbers<[1], [0], [0], [1], [0, 0, 1, 1], [], []>} : vector<8x4xf32>, vector<4x128xf32>, vector<8x128xf32> -> vector<8x128xf32>
    %c0_3 = arith.constant 0 : index
    %c0_4 = arith.constant 0 : index
    %3 = vector.load %arg3[%c0_3, %c0_4] : memref<1x128xf32, #tpu.memory_space<vmem>>, vector<1x128xf32>
    %4 = vector.broadcast %3 : vector<1x128xf32> to vector<8x128xf32>
    %5 = arith.addf %2, %4 : vector<8x128xf32>
    %c0_5 = arith.constant 0 : index
    %c0_6 = arith.constant 0 : index
    %6 = vector.load %arg2[%c0_5, %c0_6] : memref<32x128xf32, #tpu.memory_space<vmem>>, vector<32x128xf32>
    %cst_7 = arith.constant 0.000000e+00 : f32
    %7 = vector.broadcast %cst_7 : f32 to vector<1x32xf32>
    %cst_8 = arith.constant 0.000000e+00 : f32
    %8 = vector.broadcast %cst_8 : f32 to vector<1x32xf32>
    %9 = vector.extract_strided_slice %5 {offsets = [0, 0], sizes = [1, 128], strides = [1, 1]} : vector<8x128xf32> to vector<1x128xf32>
    %cst_9 = arith.constant dense<0.000000e+00> : vector<1x128xf32>
    %10 = tpu.matmul %7, %6, %cst_9 {dimension_numbers = #tpu.dot_dimension_numbers<[1], [0], [0], [1], [0, 0, 1, 1], [], []>} : vector<1x32xf32>, vector<32x128xf32>, vector<1x128xf32> -> vector<1x128xf32>
    %11 = arith.addf %9, %10 : vector<1x128xf32>
    %12 = vector.extract_strided_slice %11 {offsets = [0, 0], sizes = [1, 96], strides = [1, 1]} : vector<1x128xf32> to vector<1x96xf32>
    %13 = arith.negf %12 : vector<1x96xf32>
    %14 = math.exp %13 : vector<1x96xf32>
    %cst_10 = arith.constant 1.000000e+00 : f32
    %15 = vector.broadcast %cst_10 : f32 to vector<1x96xf32>
    %16 = arith.addf %15, %14 : vector<1x96xf32>
    %17 = arith.divf %15, %16 : vector<1x96xf32>
    %18 = vector.extract_strided_slice %17 {offsets = [0, 0], sizes = [1, 32], strides = [1, 1]} : vector<1x96xf32> to vector<1x32xf32>
    %19 = vector.extract_strided_slice %17 {offsets = [0, 32], sizes = [1, 32], strides = [1, 1]} : vector<1x96xf32> to vector<1x32xf32>
    %20 = vector.extract_strided_slice %17 {offsets = [0, 64], sizes = [1, 32], strides = [1, 1]} : vector<1x96xf32> to vector<1x32xf32>
    %21 = vector.extract_strided_slice %11 {offsets = [0, 96], sizes = [1, 32], strides = [1, 1]} : vector<1x128xf32> to vector<1x32xf32>
    %22 = math.tanh %21 : vector<1x32xf32>
    %23 = arith.mulf %19, %8 : vector<1x32xf32>
    %24 = arith.mulf %18, %22 : vector<1x32xf32>
    %25 = arith.addf %23, %24 : vector<1x32xf32>
    %26 = math.tanh %25 : vector<1x32xf32>
    %27 = arith.mulf %20, %26 : vector<1x32xf32>
    %c0_11 = arith.constant 0 : index
    %c0_12 = arith.constant 0 : index
    %28 = vector.load %arg7[%c0_11, %c0_12] : memref<8x32xf32, #tpu.memory_space<vmem>>, vector<1x32xf32>
    tpu.vector_store %arg7[%c0_11, %c0_12], %27 {strides = array<i32>} : memref<8x32xf32, #tpu.memory_space<vmem>>, vector<1x32xf32>,
    %29 = vector.extract_strided_slice %5 {offsets = [1, 0], sizes = [1, 128], strides = [1, 1]} : vector<8x128xf32> to vector<1x128xf32>
    %cst_13 = arith.constant dense<0.000000e+00> : vector<1x128xf32>
    %30 = tpu.matmul %27, %6, %cst_13 {dimension_numbers = #tpu.dot_dimension_numbers<[1], [0], [0], [1], [0, 0, 1, 1], [], []>} : vector<1x32xf32>, vector<32x128xf32>, vector<1x128xf32> -> vector<1x128xf32>
    %31 = arith.addf %29, %30 : vector<1x128xf32>
    %32 = vector.extract_strided_slice %31 {offsets = [0, 0], sizes = [1, 96], strides = [1, 1]} : vector<1x128xf32> to vector<1x96xf32>
    %33 = arith.negf %32 : vector<1x96xf32>
    %34 = math.exp %33 : vector<1x96xf32>
    %cst_14 = arith.constant 1.000000e+00 : f32
    %35 = vector.broadcast %cst_14 : f32 to vector<1x96xf32>
    %36 = arith.addf %35, %34 : vector<1x96xf32>
    %37 = arith.divf %35, %36 : vector<1x96xf32>
    %38 = vector.extract_strided_slice %37 {offsets = [0, 0], sizes = [1, 32], strides = [1, 1]} : vector<1x96xf32> to vector<1x32xf32>
    %39 = vector.extract_strided_slice %37 {offsets = [0, 32], sizes = [1, 32], strides = [1, 1]} : vector<1x96xf32> to vector<1x32xf32>
    %40 = vector.extract_strided_slice %37 {offsets = [0, 64], sizes = [1, 32], strides = [1, 1]} : vector<1x96xf32> to vector<1x32xf32>
    %41 = vector.extract_strided_slice %31 {offsets = [0, 96], sizes = [1, 32], strides = [1, 1]} : vector<1x128xf32> to vector<1x32xf32>
    %42 = math.tanh %41 : vector<1x32xf32>
    %43 = arith.mulf %39, %25 : vector<1x32xf32>
    %44 = arith.mulf %38, %42 : vector<1x32xf32>
    %45 = arith.addf %43, %44 : vector<1x32xf32>
    %46 = math.tanh %45 : vector<1x32xf32>
    %47 = arith.mulf %40, %46 : vector<1x32xf32>
    %c1 = arith.constant 1 : index
    %c0_15 = arith.constant 0 : index
    %48 = vector.load %arg7[%c1, %c0_15] : memref<8x32xf32, #tpu.memory_space<vmem>>, vector<1x32xf32>
    tpu.vector_store %arg7[%c1, %c0_15], %47 {strides = array<i32>} : memref<8x32xf32, #tpu.memory_space<vmem>>, vector<1x32xf32>,
    %49 = vector.extract_strided_slice %5 {offsets = [2, 0], sizes = [1, 128], strides = [1, 1]} : vector<8x128xf32> to vector<1x128xf32>
    %cst_16 = arith.constant dense<0.000000e+00> : vector<1x128xf32>
    %50 = tpu.matmul %47, %6, %cst_16 {dimension_numbers = #tpu.dot_dimension_numbers<[1], [0], [0], [1], [0, 0, 1, 1], [], []>} : vector<1x32xf32>, vector<32x128xf32>, vector<1x128xf32> -> vector<1x128xf32>
    %51 = arith.addf %49, %50 : vector<1x128xf32>
    %52 = vector.extract_strided_slice %51 {offsets = [0, 0], sizes = [1, 96], strides = [1, 1]} : vector<1x128xf32> to vector<1x96xf32>
    %53 = arith.negf %52 : vector<1x96xf32>
    %54 = math.exp %53 : vector<1x96xf32>
    %cst_17 = arith.constant 1.000000e+00 : f32
    %55 = vector.broadcast %cst_17 : f32 to vector<1x96xf32>
    %56 = arith.addf %55, %54 : vector<1x96xf32>
    %57 = arith.divf %55, %56 : vector<1x96xf32>
    %58 = vector.extract_strided_slice %57 {offsets = [0, 0], sizes = [1, 32], strides = [1, 1]} : vector<1x96xf32> to vector<1x32xf32>
    %59 = vector.extract_strided_slice %57 {offsets = [0, 32], sizes = [1, 32], strides = [1, 1]} : vector<1x96xf32> to vector<1x32xf32>
    %60 = vector.extract_strided_slice %57 {offsets = [0, 64], sizes = [1, 32], strides = [1, 1]} : vector<1x96xf32> to vector<1x32xf32>
    %61 = vector.extract_strided_slice %51 {offsets = [0, 96], sizes = [1, 32], strides = [1, 1]} : vector<1x128xf32> to vector<1x32xf32>
    %62 = math.tanh %61 : vector<1x32xf32>
    %63 = arith.mulf %59, %45 : vector<1x32xf32>
    %64 = arith.mulf %58, %62 : vector<1x32xf32>
    %65 = arith.addf %63, %64 : vector<1x32xf32>
    %66 = math.tanh %65 : vector<1x32xf32>
    %67 = arith.mulf %60, %66 : vector<1x32xf32>
    %c2 = arith.constant 2 : index
    %c0_18 = arith.constant 0 : index
    %68 = vector.load %arg7[%c2, %c0_18] : memref<8x32xf32, #tpu.memory_space<vmem>>, vector<1x32xf32>
    tpu.vector_store %arg7[%c2, %c0_18], %67 {strides = array<i32>} : memref<8x32xf32, #tpu.memory_space<vmem>>, vector<1x32xf32>,
    %69 = vector.extract_strided_slice %5 {offsets = [3, 0], sizes = [1, 128], strides = [1, 1]} : vector<8x128xf32> to vector<1x128xf32>
    %cst_19 = arith.constant dense<0.000000e+00> : vector<1x128xf32>
    %70 = tpu.matmul %67, %6, %cst_19 {dimension_numbers = #tpu.dot_dimension_numbers<[1], [0], [0], [1], [0, 0, 1, 1], [], []>} : vector<1x32xf32>, vector<32x128xf32>, vector<1x128xf32> -> vector<1x128xf32>
    %71 = arith.addf %69, %70 : vector<1x128xf32>
    %72 = vector.extract_strided_slice %71 {offsets = [0, 0], sizes = [1, 96], strides = [1, 1]} : vector<1x128xf32> to vector<1x96xf32>
    %73 = arith.negf %72 : vector<1x96xf32>
    %74 = math.exp %73 : vector<1x96xf32>
    %cst_20 = arith.constant 1.000000e+00 : f32
    %75 = vector.broadcast %cst_20 : f32 to vector<1x96xf32>
    %76 = arith.addf %75, %74 : vector<1x96xf32>
    %77 = arith.divf %75, %76 : vector<1x96xf32>
    %78 = vector.extract_strided_slice %77 {offsets = [0, 0], sizes = [1, 32], strides = [1, 1]} : vector<1x96xf32> to vector<1x32xf32>
    %79 = vector.extract_strided_slice %77 {offsets = [0, 32], sizes = [1, 32], strides = [1, 1]} : vector<1x96xf32> to vector<1x32xf32>
    %80 = vector.extract_strided_slice %77 {offsets = [0, 64], sizes = [1, 32], strides = [1, 1]} : vector<1x96xf32> to vector<1x32xf32>
    %81 = vector.extract_strided_slice %71 {offsets = [0, 96], sizes = [1, 32], strides = [1, 1]} : vector<1x128xf32> to vector<1x32xf32>
    %82 = math.tanh %81 : vector<1x32xf32>
    %83 = arith.mulf %79, %65 : vector<1x32xf32>
    %84 = arith.mulf %78, %82 : vector<1x32xf32>
    %85 = arith.addf %83, %84 : vector<1x32xf32>
    %86 = math.tanh %85 : vector<1x32xf32>
    %87 = arith.mulf %80, %86 : vector<1x32xf32>
    %c3 = arith.constant 3 : index
    %c0_21 = arith.constant 0 : index
    %88 = vector.load %arg7[%c3, %c0_21] : memref<8x32xf32, #tpu.memory_space<vmem>>, vector<1x32xf32>
    tpu.vector_store %arg7[%c3, %c0_21], %87 {strides = array<i32>} : memref<8x32xf32, #tpu.memory_space<vmem>>, vector<1x32xf32>,
    %89 = vector.extract_strided_slice %5 {offsets = [4, 0], sizes = [1, 128], strides = [1, 1]} : vector<8x128xf32> to vector<1x128xf32>
    %cst_22 = arith.constant dense<0.000000e+00> : vector<1x128xf32>
    %90 = tpu.matmul %87, %6, %cst_22 {dimension_numbers = #tpu.dot_dimension_numbers<[1], [0], [0], [1], [0, 0, 1, 1], [], []>} : vector<1x32xf32>, vector<32x128xf32>, vector<1x128xf32> -> vector<1x128xf32>
    %91 = arith.addf %89, %90 : vector<1x128xf32>
    %92 = vector.extract_strided_slice %91 {offsets = [0, 0], sizes = [1, 96], strides = [1, 1]} : vector<1x128xf32> to vector<1x96xf32>
    %93 = arith.negf %92 : vector<1x96xf32>
    %94 = math.exp %93 : vector<1x96xf32>
    %cst_23 = arith.constant 1.000000e+00 : f32
    %95 = vector.broadcast %cst_23 : f32 to vector<1x96xf32>
    %96 = arith.addf %95, %94 : vector<1x96xf32>
    %97 = arith.divf %95, %96 : vector<1x96xf32>
    %98 = vector.extract_strided_slice %97 {offsets = [0, 0], sizes = [1, 32], strides = [1, 1]} : vector<1x96xf32> to vector<1x32xf32>
    %99 = vector.extract_strided_slice %97 {offsets = [0, 32], sizes = [1, 32], strides = [1, 1]} : vector<1x96xf32> to vector<1x32xf32>
    %100 = vector.extract_strided_slice %97 {offsets = [0, 64], sizes = [1, 32], strides = [1, 1]} : vector<1x96xf32> to vector<1x32xf32>
    %101 = vector.extract_strided_slice %91 {offsets = [0, 96], sizes = [1, 32], strides = [1, 1]} : vector<1x128xf32> to vector<1x32xf32>
    %102 = math.tanh %101 : vector<1x32xf32>
    %103 = arith.mulf %99, %85 : vector<1x32xf32>
    %104 = arith.mulf %98, %102 : vector<1x32xf32>
    %105 = arith.addf %103, %104 : vector<1x32xf32>
    %106 = math.tanh %105 : vector<1x32xf32>
    %107 = arith.mulf %100, %106 : vector<1x32xf32>
    %c4 = arith.constant 4 : index
    %c0_24 = arith.constant 0 : index
    %108 = vector.load %arg7[%c4, %c0_24] : memref<8x32xf32, #tpu.memory_space<vmem>>, vector<1x32xf32>
    tpu.vector_store %arg7[%c4, %c0_24], %107 {strides = array<i32>} : memref<8x32xf32, #tpu.memory_space<vmem>>, vector<1x32xf32>,
    %109 = vector.extract_strided_slice %5 {offsets = [5, 0], sizes = [1, 128], strides = [1, 1]} : vector<8x128xf32> to vector<1x128xf32>
    %cst_25 = arith.constant dense<0.000000e+00> : vector<1x128xf32>
    %110 = tpu.matmul %107, %6, %cst_25 {dimension_numbers = #tpu.dot_dimension_numbers<[1], [0], [0], [1], [0, 0, 1, 1], [], []>} : vector<1x32xf32>, vector<32x128xf32>, vector<1x128xf32> -> vector<1x128xf32>
    %111 = arith.addf %109, %110 : vector<1x128xf32>
    %112 = vector.extract_strided_slice %111 {offsets = [0, 0], sizes = [1, 96], strides = [1, 1]} : vector<1x128xf32> to vector<1x96xf32>
    %113 = arith.negf %112 : vector<1x96xf32>
    %114 = math.exp %113 : vector<1x96xf32>
    %cst_26 = arith.constant 1.000000e+00 : f32
    %115 = vector.broadcast %cst_26 : f32 to vector<1x96xf32>
    %116 = arith.addf %115, %114 : vector<1x96xf32>
    %117 = arith.divf %115, %116 : vector<1x96xf32>
    %118 = vector.extract_strided_slice %117 {offsets = [0, 0], sizes = [1, 32], strides = [1, 1]} : vector<1x96xf32> to vector<1x32xf32>
    %119 = vector.extract_strided_slice %117 {offsets = [0, 32], sizes = [1, 32], strides = [1, 1]} : vector<1x96xf32> to vector<1x32xf32>
    %120 = vector.extract_strided_slice %117 {offsets = [0, 64], sizes = [1, 32], strides = [1, 1]} : vector<1x96xf32> to vector<1x32xf32>
    %121 = vector.extract_strided_slice %111 {offsets = [0, 96], sizes = [1, 32], strides = [1, 1]} : vector<1x128xf32> to vector<1x32xf32>
    %122 = math.tanh %121 : vector<1x32xf32>
    %123 = arith.mulf %119, %105 : vector<1x32xf32>
    %124 = arith.mulf %118, %122 : vector<1x32xf32>
    %125 = arith.addf %123, %124 : vector<1x32xf32>
    %126 = math.tanh %125 : vector<1x32xf32>
    %127 = arith.mulf %120, %126 : vector<1x32xf32>
    %c5 = arith.constant 5 : index
    %c0_27 = arith.constant 0 : index
    %128 = vector.load %arg7[%c5, %c0_27] : memref<8x32xf32, #tpu.memory_space<vmem>>, vector<1x32xf32>
    tpu.vector_store %arg7[%c5, %c0_27], %127 {strides = array<i32>} : memref<8x32xf32, #tpu.memory_space<vmem>>, vector<1x32xf32>,
    %129 = vector.extract_strided_slice %5 {offsets = [6, 0], sizes = [1, 128], strides = [1, 1]} : vector<8x128xf32> to vector<1x128xf32>
    %cst_28 = arith.constant dense<0.000000e+00> : vector<1x128xf32>
    %130 = tpu.matmul %127, %6, %cst_28 {dimension_numbers = #tpu.dot_dimension_numbers<[1], [0], [0], [1], [0, 0, 1, 1], [], []>} : vector<1x32xf32>, vector<32x128xf32>, vector<1x128xf32> -> vector<1x128xf32>
    %131 = arith.addf %129, %130 : vector<1x128xf32>
    %132 = vector.extract_strided_slice %131 {offsets = [0, 0], sizes = [1, 96], strides = [1, 1]} : vector<1x128xf32> to vector<1x96xf32>
    %133 = arith.negf %132 : vector<1x96xf32>
    %134 = math.exp %133 : vector<1x96xf32>
    %cst_29 = arith.constant 1.000000e+00 : f32
    %135 = vector.broadcast %cst_29 : f32 to vector<1x96xf32>
    %136 = arith.addf %135, %134 : vector<1x96xf32>
    %137 = arith.divf %135, %136 : vector<1x96xf32>
    %138 = vector.extract_strided_slice %137 {offsets = [0, 0], sizes = [1, 32], strides = [1, 1]} : vector<1x96xf32> to vector<1x32xf32>
    %139 = vector.extract_strided_slice %137 {offsets = [0, 32], sizes = [1, 32], strides = [1, 1]} : vector<1x96xf32> to vector<1x32xf32>
    %140 = vector.extract_strided_slice %137 {offsets = [0, 64], sizes = [1, 32], strides = [1, 1]} : vector<1x96xf32> to vector<1x32xf32>
    %141 = vector.extract_strided_slice %131 {offsets = [0, 96], sizes = [1, 32], strides = [1, 1]} : vector<1x128xf32> to vector<1x32xf32>
    %142 = math.tanh %141 : vector<1x32xf32>
    %143 = arith.mulf %139, %125 : vector<1x32xf32>
    %144 = arith.mulf %138, %142 : vector<1x32xf32>
    %145 = arith.addf %143, %144 : vector<1x32xf32>
    %146 = math.tanh %145 : vector<1x32xf32>
    %147 = arith.mulf %140, %146 : vector<1x32xf32>
    %c6 = arith.constant 6 : index
    %c0_30 = arith.constant 0 : index
    %148 = vector.load %arg7[%c6, %c0_30] : memref<8x32xf32, #tpu.memory_space<vmem>>, vector<1x32xf32>
    tpu.vector_store %arg7[%c6, %c0_30], %147 {strides = array<i32>} : memref<8x32xf32, #tpu.memory_space<vmem>>, vector<1x32xf32>,
    %149 = vector.extract_strided_slice %5 {offsets = [7, 0], sizes = [1, 128], strides = [1, 1]} : vector<8x128xf32> to vector<1x128xf32>
    %cst_31 = arith.constant dense<0.000000e+00> : vector<1x128xf32>
    %150 = tpu.matmul %147, %6, %cst_31 {dimension_numbers = #tpu.dot_dimension_numbers<[1], [0], [0], [1], [0, 0, 1, 1], [], []>} : vector<1x32xf32>, vector<32x128xf32>, vector<1x128xf32> -> vector<1x128xf32>
    %151 = arith.addf %149, %150 : vector<1x128xf32>
    %152 = vector.extract_strided_slice %151 {offsets = [0, 0], sizes = [1, 96], strides = [1, 1]} : vector<1x128xf32> to vector<1x96xf32>
    %153 = arith.negf %152 : vector<1x96xf32>
    %154 = math.exp %153 : vector<1x96xf32>
    %cst_32 = arith.constant 1.000000e+00 : f32
    %155 = vector.broadcast %cst_32 : f32 to vector<1x96xf32>
    %156 = arith.addf %155, %154 : vector<1x96xf32>
    %157 = arith.divf %155, %156 : vector<1x96xf32>
    %158 = vector.extract_strided_slice %157 {offsets = [0, 0], sizes = [1, 32], strides = [1, 1]} : vector<1x96xf32> to vector<1x32xf32>
    %159 = vector.extract_strided_slice %157 {offsets = [0, 32], sizes = [1, 32], strides = [1, 1]} : vector<1x96xf32> to vector<1x32xf32>
    %160 = vector.extract_strided_slice %157 {offsets = [0, 64], sizes = [1, 32], strides = [1, 1]} : vector<1x96xf32> to vector<1x32xf32>
    %161 = vector.extract_strided_slice %151 {offsets = [0, 96], sizes = [1, 32], strides = [1, 1]} : vector<1x128xf32> to vector<1x32xf32>
    %162 = math.tanh %161 : vector<1x32xf32>
    %163 = arith.mulf %159, %145 : vector<1x32xf32>
    %164 = arith.mulf %158, %162 : vector<1x32xf32>
    %165 = arith.addf %163, %164 : vector<1x32xf32>
    %166 = math.tanh %165 : vector<1x32xf32>
    %167 = arith.mulf %160, %166 : vector<1x32xf32>
    %c7 = arith.constant 7 : index
    %c0_33 = arith.constant 0 : index
    %168 = vector.load %arg7[%c7, %c0_33] : memref<8x32xf32, #tpu.memory_space<vmem>>, vector<1x32xf32>
    tpu.vector_store %arg7[%c7, %c0_33], %167 {strides = array<i32>} : memref<8x32xf32, #tpu.memory_space<vmem>>, vector<1x32xf32>,
    %c0_34 = arith.constant 0 : index
    %c0_35 = arith.constant 0 : index
    %169 = vector.load %arg7[%c0_34, %c0_35] : memref<8x32xf32, #tpu.memory_space<vmem>>, vector<8x32xf32>
    %c0_36 = arith.constant 0 : index
    %c0_37 = arith.constant 0 : index
    %170 = vector.load %arg4[%c0_36, %c0_37] : memref<32x1xf32, #tpu.memory_space<vmem>>, vector<32x1xf32>
    %cst_38 = arith.constant dense<0.000000e+00> : vector<8x1xf32>
    %171 = tpu.matmul %169, %170, %cst_38 {dimension_numbers = #tpu.dot_dimension_numbers<[1], [0], [0], [1], [0, 0, 1, 1], [], []>} : vector<8x32xf32>, vector<32x1xf32>, vector<8x1xf32> -> vector<8x1xf32>
    %c0_39 = arith.constant 0 : index
    %c0_40 = arith.constant 0 : index
    %172 = vector.load %arg5[%c0_39, %c0_40] : memref<1x1xf32, #tpu.memory_space<vmem>>, vector<1x1xf32>
    %173 = vector.broadcast %172 : vector<1x1xf32> to vector<8x1xf32>
    %174 = arith.addf %171, %173 : vector<8x1xf32>
    %c0_41 = arith.constant 0 : index
    %c0_42 = arith.constant 0 : index
    %175 = vector.load %arg6[%c0_41, %c0_42] : memref<8x1xf32, #tpu.memory_space<vmem>>, vector<8x1xf32>
    tpu.vector_store %arg6[%c0_41, %c0_42], %174 {strides = array<i32>} : memref<8x1xf32, #tpu.memory_space<vmem>>, vector<8x1xf32>,
    return
  }
}

</mosaic_0001>

<llo_original>
// kernel: tpu_custom_call.1
$region0: #{tpu_custom_call.1}
  #allocation0 [shape = 'u32[]', space=smem, size = 0x4, offset = 0x4, fixed_abs, tag = 'smem constant byte address 0x4 - core index']
  #allocation1 [shape = 'u32[144,128]{1,0:T(1,128)}', space=vmem, size = 0x12000, scoped, tag = 'internal scratch']
  #allocation2 [shape = 'f32[8,32]{1,0:T(8,128)}', space=vmem, size = 0x1000, scoped, tag = 'scratch operand']
  #allocation3 [shape = 'f32[1,1]{1,0:T(1,128)S(1)}', space=vmem, size = 0x200, scoped, tag = 'scoped memory for tpu_custom_call.1']
  %s0 = inlined_call_operand.vmem [shape: f32[8,4], index: 0, kind: input, shape index: {}]
  %s1 = inlined_call_operand.vmem [shape: f32[4,128], index: 1, kind: input, shape index: {}]
  %s2 = inlined_call_operand.vmem [shape: f32[32,128], index: 2, kind: input, shape index: {}]
  %s3 = inlined_call_operand.vmem [shape: f32[1,128], index: 3, kind: input, shape index: {}]
  %s4 = inlined_call_operand.vmem [shape: f32[32,1], index: 4, kind: input, shape index: {}]
  %s5 = inlined_call_operand.<no memory space> [shape: f32[1,1], index: 5, kind: input, shape index: {}]
  %s6 = inlined_call_operand.vmem [shape: f32[8,1], index: 6, kind: output, shape index: {}]
  %s7 = sld [smem:[#allocation0]]
  $region34: #{tpu_custom_call.1} parent=0
    _
  %s9 = ssub.s32 1, %s7
  %s10 = scalar_select 0, %s9, %s7
  %v11 = vstv %s5
  %12 = vst [vmem:[#allocation3] sm:$0x1] %v11
  // Predicated region
  $region2: #{tpu_custom_call.1} parent=0 // pred_check
    _
  $region3: #{tpu_custom_call.1} parent=0 // pred_check_branch
    %14 = sbr.rel (0) target = $region5
  $region4: #{tpu_custom_call.1} parent=0 // pred_region
    _
  $region5: #{tpu_custom_call.1} parent=0 // pred_fallthru
    _
  // Predicated region
  $region6: #{tpu_custom_call.1} parent=0 // pred_check
    _
  $region7: #{tpu_custom_call.1} parent=0 // pred_check_branch
    %16 = sbr.rel (0) target = $region9
  $region8: #{tpu_custom_call.1} parent=0 // pred_region
    _
  $region9: #{tpu_custom_call.1} parent=0 // pred_fallthru
    _
  // Predicated region
  $region10: #{tpu_custom_call.1} parent=0 // pred_check
    _
  $region11: #{tpu_custom_call.1} parent=0 // pred_check_branch
    %18 = sbr.rel (0) target = $region13
  $region12: #{tpu_custom_call.1} parent=0 // pred_region
    _
  $region13: #{tpu_custom_call.1} parent=0 // pred_fallthru
    _
  // Predicated region
  $region14: #{tpu_custom_call.1} parent=0 // pred_check
    _
  $region15: #{tpu_custom_call.1} parent=0 // pred_check_branch
    %20 = sbr.rel (0) target = $region17
  $region16: #{tpu_custom_call.1} parent=0 // pred_region
    _
  $region17: #{tpu_custom_call.1} parent=0 // pred_fallthru
    _
  // Predicated region
  $region18: #{tpu_custom_call.1} parent=0 // pred_check
    _
  $region19: #{tpu_custom_call.1} parent=0 // pred_check_branch
    %22 = sbr.rel (0) target = $region21
  $region20: #{tpu_custom_call.1} parent=0 // pred_region
    _
  $region21: #{tpu_custom_call.1} parent=0 // pred_fallthru
    _
  // Predicated region
  $region22: #{tpu_custom_call.1} parent=0 // pred_check
    _
  $region23: #{tpu_custom_call.1} parent=0 // pred_check_branch
    %24 = sbr.rel (0) target = $region25
  $region24: #{tpu_custom_call.1} parent=0 // pred_region
    _
  $region25: #{tpu_custom_call.1} parent=0 // pred_fallthru
    _
  %v25 = vld [vmem:[%s0] sm:$0xff]
  %v26 = vld [vmem:[%s1] sm:$0xf]
  %v27 = vld [vmem:[%s3] sm:$0x1]
  %v29 = vlaneseq
  %v30 = vshrl.u32 %v29, 7
  %v31 = vsub.s32 0, %v30
  %v32 = vrot.slane %v27, %v31
  %vm34 = vcmask 31744
  %v36 = vsel %vm34, %v25, 0
  %vm38 = vcmask 1043456
  %v40 = vsel %vm38, %v26, 0
  %42 = vmatprep.subr.mxu0 0.0
  %43 = vmatpush1.msra.mxu0 %v40
  %44 = vmatprep.subr.mxu0 0.0
  %45 = vmatpush1.msra.mxu0 0.0
  %46 = vmatprep.subr.mxu0 0.0
  %47 = vmatpush1.msra.mxu0 0.0
  %48 = vmatprep.subr.mxu0 0.0
  %49 = vmatpush1.msra.mxu0 0.0
  %50 = vmatprep.subr.mxu0 0.0
  %51 = vmatpush1.msra.mxu0 0.0
  %52 = vmatprep.subr.mxu0 0.0
  %53 = vmatpush1.msra.mxu0 0.0
  %54 = vmatprep.subr.mxu0 0.0
  %55 = vmatpush1.msra.mxu0 0.0
  %56 = vmatprep.subr.mxu0 0.0
  %57 = vmatpush1.msra.mxu0 0.0
  %58 = vmatprep.subr.mxu0 0.0
  %59 = vmatpush1.msra.mxu0 0.0
  %60 = vmatprep.subr.mxu0 0.0
  %61 = vmatpush1.msra.mxu0 0.0
  %62 = vmatprep.subr.mxu0 0.0
  %63 = vmatpush1.msra.mxu0 0.0
  %64 = vmatprep.subr.mxu0 0.0
  %65 = vmatpush1.msra.mxu0 0.0
  %66 = vmatprep.subr.mxu0 0.0
  %67 = vmatpush1.msra.mxu0 0.0
  %68 = vmatprep.subr.mxu0 0.0
  %69 = vmatpush1.msra.mxu0 0.0
  %70 = vmatprep.subr.mxu0 0.0
  %71 = vmatpush1.msra.mxu0 0.0
  %72 = vmatprep.subr.mxu0 0.0
  %73 = vmatpush1.msra.mxu0 0.0
  %74 = vmatprep.subr.mxu0 0.0
  %75 = vmatpush1.msra.mxu0 0.0
  %76 = vmatprep.subr.mxu0 0.0
  %77 = vmatpush1.msra.mxu0 0.0
  %78 = vmatprep.subr.mxu0 0.0
  %79 = vmatpush1.msra.mxu0 0.0
  %80 = vmatprep.subr.mxu0 0.0
  %81 = vmatpush1.msra.mxu0 0.0
  %82 = vmatprep.subr.mxu0 0.0
  %83 = vmatpush1.msra.mxu0 0.0
  %84 = vmatprep.subr.mxu0 0.0
  %85 = vmatpush1.msra.mxu0 0.0
  %86 = vmatprep.subr.mxu0 0.0
  %87 = vmatpush1.msra.mxu0 0.0
  %88 = vmatprep.subr.mxu0 0.0
  %89 = vmatpush1.msra.mxu0 0.0
  %90 = vmatprep.subr.mxu0 0.0
  %91 = vmatpush1.msra.mxu0 0.0
  %92 = vmatprep.subr.mxu0 0.0
  %93 = vmatpush1.msra.mxu0 0.0
  %94 = vmatprep.subr.mxu0 0.0
  %95 = vmatpush1.msra.mxu0 0.0
  %96 = vmatprep.subr.mxu0 0.0
  %97 = vmatpush1.msra.mxu0 0.0
  %98 = vmatprep.subr.mxu0 0.0
  %99 = vmatpush1.msra.mxu0 0.0
  %100 = vmatprep.subr.mxu0 0.0
  %101 = vmatpush1.msra.mxu0 0.0
  %102 = vmatprep.subr.mxu0 0.0
  %103 = vmatpush1.msra.mxu0 0.0
  %104 = vmatprep.subr.mxu0 0.0
  %105 = vmatpush1.msra.mxu0 0.0
  %106 = vmatprep.mubr.f32.mxu0 0.0
  %107 = vmatmul.mubr.f32.gmra.mrb[0].mxu0 %v36
  %v108 = vpop.f32.mrb[0].mxu0
  %v109 = vadd.f32 %v32, %v108
  %v110 = vpop.f32.mrb[0].mxu0
  %111 = vdwg.mxu0
  %v112 = vld [vmem:[%s2] sm:$0xff]
  %v113 = vld [vmem:[%s2 + $0x8] sm:$0xff]
  %v114 = vld [vmem:[%s2 + $0x10] sm:$0xff]
  %v115 = vld [vmem:[%s2 + $0x18] sm:$0xff]
  %vm116 = vcmask 261120
  %v118 = vsel %vm116, 0.0, 0
  %120 = vmatprep.subr.mxu0 0.0
  %121 = vmatpush1.msra.mxu0 %v112
  %122 = vmatprep.subr.mxu0 0.0
  %123 = vmatpush1.msra.mxu0 %v113
  %124 = vmatprep.subr.mxu0 0.0
  %125 = vmatpush1.msra.mxu0 %v114
  %126 = vmatprep.subr.mxu0 0.0
  %127 = vmatpush1.msra.mxu0 %v115
  %128 = vmatprep.subr.mxu0 0.0
  %129 = vmatpush1.msra.mxu0 0.0
  %130 = vmatprep.subr.mxu0 0.0
  %131 = vmatpush1.msra.mxu0 0.0
  %132 = vmatprep.subr.mxu0 0.0
  %133 = vmatpush1.msra.mxu0 0.0
  %134 = vmatprep.subr.mxu0 0.0
  %135 = vmatpush1.msra.mxu0 0.0
  %136 = vmatprep.subr.mxu0 0.0
  %137 = vmatpush1.msra.mxu0 0.0
  %138 = vmatprep.subr.mxu0 0.0
  %139 = vmatpush1.msra.mxu0 0.0
  %140 = vmatprep.subr.mxu0 0.0
  %141 = vmatpush1.msra.mxu0 0.0
  %142 = vmatprep.subr.mxu0 0.0
  %143 = vmatpush1.msra.mxu0 0.0
  %144 = vmatprep.subr.mxu0 0.0
  %145 = vmatpush1.msra.mxu0 0.0
  %146 = vmatprep.subr.mxu0 0.0
  %147 = vmatpush1.msra.mxu0 0.0
  %148 = vmatprep.subr.mxu0 0.0
  %149 = vmatpush1.msra.mxu0 0.0
  %150 = vmatprep.subr.mxu0 0.0
  %151 = vmatpush1.msra.mxu0 0.0
  %152 = vmatprep.subr.mxu0 0.0
  %153 = vmatpush1.msra.mxu0 0.0
  %154 = vmatprep.subr.mxu0 0.0
  %155 = vmatpush1.msra.mxu0 0.0
  %156 = vmatprep.subr.mxu0 0.0
  %157 = vmatpush1.msra.mxu0 0.0
  %158 = vmatprep.subr.mxu0 0.0
  %159 = vmatpush1.msra.mxu0 0.0
  %160 = vmatprep.subr.mxu0 0.0
  %161 = vmatpush1.msra.mxu0 0.0
  %162 = vmatprep.subr.mxu0 0.0
  %163 = vmatpush1.msra.mxu0 0.0
  %164 = vmatprep.subr.mxu0 0.0
  %165 = vmatpush1.msra.mxu0 0.0
  %166 = vmatprep.subr.mxu0 0.0
  %167 = vmatpush1.msra.mxu0 0.0
  %168 = vmatprep.subr.mxu0 0.0
  %169 = vmatpush1.msra.mxu0 0.0
  %170 = vmatprep.subr.mxu0 0.0
  %171 = vmatpush1.msra.mxu0 0.0
  %172 = vmatprep.subr.mxu0 0.0
  %173 = vmatpush1.msra.mxu0 0.0
  %174 = vmatprep.subr.mxu0 0.0
  %175 = vmatpush1.msra.mxu0 0.0
  %176 = vmatprep.subr.mxu0 0.0
  %177 = vmatpush1.msra.mxu0 0.0
  %178 = vmatprep.subr.mxu0 0.0
  %179 = vmatpush1.msra.mxu0 0.0
  %180 = vmatprep.subr.mxu0 0.0
  %181 = vmatpush1.msra.mxu0 0.0
  %182 = vmatprep.subr.mxu0 0.0
  %183 = vmatpush1.msra.mxu0 0.0
  %184 = vmatprep.mubr.f32.mxu0 0.0
  %185 = vmatmul.mubr.f32.gmra.mrb[0].mxu0 %v118
  %v186 = vpop.f32.mrb[0].mxu0
  %v187 = vadd.f32 0.0, %v186
  %v188 = vpop.f32.mrb[0].mxu0
  %189 = vdwg.mxu0
  %v190 = vadd.f32 %v109, %v187
  %v191 = vxor.u32 %v190, 2147483648
  %v192 = vmul.f32 %v191, 1.442695
  %v193 = vpow.pop %v192
  %v194 = vadd.f32 %v193, 1.0
  %v195 = vrcp.pop %v194
  %v196 = vmul.f32 1.0, %v195
  %v197 = vtanh.pop %v190
  %v198 = vmul.f32 %v196, 0.0
  %200 = vrot.lane.b32.xlu0 %v197, 32
  %v201 = vpop.permute.xlu0 %200
  %v203 = vmul.f32 %v196, %v201
  %205 = vrot.lane.b32.xlu0 %v203, 32
  %v206 = vpop.permute.xlu0 %205
  %v208 = vadd.f32 %v198, %v206
  %v209 = vtanh.pop %v208
  %211 = vrot.lane.b32.xlu0 %v209, 32
  %v212 = vpop.permute.xlu0 %211
  %v214 = vmul.f32 %v196, %v212
  %216 = vrot.lane.b32.xlu0 %v214, 64
  %v217 = vpop.permute.xlu0 %216
  %vm219 = vcmask 253952
  %220 = vst.msk [vmem:[#allocation2] sm:$0x1] %vm219, %v217
  %v221 = vsel %vm116, %v217, 0
  %223 = vmatprep.subr.mxu0 0.0
  %224 = vmatpush1.msra.mxu0 %v112
  %225 = vmatprep.subr.mxu0 0.0
  %226 = vmatpush1.msra.mxu0 %v113
  %227 = vmatprep.subr.mxu0 0.0
  %228 = vmatpush1.msra.mxu0 %v114
  %229 = vmatprep.subr.mxu0 0.0
  %230 = vmatpush1.msra.mxu0 %v115
  %231 = vmatprep.subr.mxu0 0.0
  %232 = vmatpush1.msra.mxu0 0.0
  %233 = vmatprep.subr.mxu0 0.0
  %234 = vmatpush1.msra.mxu0 0.0
  %235 = vmatprep.subr.mxu0 0.0
  %236 = vmatpush1.msra.mxu0 0.0
  %237 = vmatprep.subr.mxu0 0.0
  %238 = vmatpush1.msra.mxu0 0.0
  %239 = vmatprep.subr.mxu0 0.0
  %240 = vmatpush1.msra.mxu0 0.0
  %241 = vmatprep.subr.mxu0 0.0
  %242 = vmatpush1.msra.mxu0 0.0
  %243 = vmatprep.subr.mxu0 0.0
  %244 = vmatpush1.msra.mxu0 0.0
  %245 = vmatprep.subr.mxu0 0.0
  %246 = vmatpush1.msra.mxu0 0.0
  %247 = vmatprep.subr.mxu0 0.0
  %248 = vmatpush1.msra.mxu0 0.0
  %249 = vmatprep.subr.mxu0 0.0
  %250 = vmatpush1.msra.mxu0 0.0
  %251 = vmatprep.subr.mxu0 0.0
  %252 = vmatpush1.msra.mxu0 0.0
  %253 = vmatprep.subr.mxu0 0.0
  %254 = vmatpush1.msra.mxu0 0.0
  %255 = vmatprep.subr.mxu0 0.0
  %256 = vmatpush1.msra.mxu0 0.0
  %257 = vmatprep.subr.mxu0 0.0
  %258 = vmatpush1.msra.mxu0 0.0
  %259 = vmatprep.subr.mxu0 0.0
  %260 = vmatpush1.msra.mxu0 0.0
  %261 = vmatprep.subr.mxu0 0.0
  %262 = vmatpush1.msra.mxu0 0.0
  %263 = vmatprep.subr.mxu0 0.0
  %264 = vmatpush1.msra.mxu0 0.0
  %265 = vmatprep.subr.mxu0 0.0
  %266 = vmatpush1.msra.mxu0 0.0
  %267 = vmatprep.subr.mxu0 0.0
  %268 = vmatpush1.msra.mxu0 0.0
  %269 = vmatprep.subr.mxu0 0.0
  %270 = vmatpush1.msra.mxu0 0.0
  %271 = vmatprep.subr.mxu0 0.0
  %272 = vmatpush1.msra.mxu0 0.0
  %273 = vmatprep.subr.mxu0 0.0
  %274 = vmatpush1.msra.mxu0 0.0
  %275 = vmatprep.subr.mxu0 0.0
  %276 = vmatpush1.msra.mxu0 0.0
  %277 = vmatprep.subr.mxu0 0.0
  %278 = vmatpush1.msra.mxu0 0.0
  %279 = vmatprep.subr.mxu0 0.0
  %280 = vmatpush1.msra.mxu0 0.0
  %281 = vmatprep.subr.mxu0 0.0
  %282 = vmatpush1.msra.mxu0 0.0
  %283 = vmatprep.subr.mxu0 0.0
  %284 = vmatpush1.msra.mxu0 0.0
  %285 = vmatprep.subr.mxu0 0.0
  %286 = vmatpush1.msra.mxu0 0.0
  %287 = vmatprep.mubr.f32.mxu0 0.0
  %288 = vmatmul.mubr.f32.gmra.mrb[0].mxu0 %v221
  %v289 = vpop.f32.mrb[0].mxu0
  %v290 = vadd.f32 0.0, %v289
  %v291 = vpop.f32.mrb[0].mxu0
  %292 = vdwg.mxu0
  %v294 = vrot.slane %v290, 7
  %v296 = vadd.f32 %v109, %v294
  %v297 = vxor.u32 %v296, 2147483648
  %v298 = vmul.f32 %v297, 1.442695
  %v299 = vpow.pop %v298
  %v300 = vadd.f32 %v299, 1.0
  %v301 = vrcp.pop %v300
  %v302 = vmul.f32 1.0, %v301
  %v303 = vtanh.pop %v296
  %v305 = vrot.slane %v208, 7
  %v307 = vmul.f32 %v302, %v305
  %309 = vrot.lane.b32.xlu0 %v303, 32
  %v310 = vpop.permute.xlu0 %309
  %v312 = vmul.f32 %v302, %v310
  %314 = vrot.lane.b32.xlu0 %v312, 32
  %v315 = vpop.permute.xlu0 %314
  %v317 = vadd.f32 %v307, %v315
  %v318 = vtanh.pop %v317
  %320 = vrot.lane.b32.xlu0 %v318, 32
  %v321 = vpop.permute.xlu0 %320
  %v323 = vmul.f32 %v302, %v321
  %325 = vrot.lane.b32.xlu0 %v323, 64
  %v326 = vpop.permute.xlu0 %325
  %vm328 = vcmask 254977
  %329 = vst.msk [vmem:[#allocation2] sm:$0x2] %vm328, %v326
  %v330 = vrot.slane %v323, 1
  %331 = vrot.lane.b32.xlu0 %v330, 64
  %v332 = vpop.permute.xlu0 %331
  %v333 = vsel %vm116, %v332, 0
  %335 = vmatprep.subr.mxu0 0.0
  %336 = vmatpush1.msra.mxu0 %v112
  %337 = vmatprep.subr.mxu0 0.0
  %338 = vmatpush1.msra.mxu0 %v113
  %339 = vmatprep.subr.mxu0 0.0
  %340 = vmatpush1.msra.mxu0 %v114
  %341 = vmatprep.subr.mxu0 0.0
  %342 = vmatpush1.msra.mxu0 %v115
  %343 = vmatprep.subr.mxu0 0.0
  %344 = vmatpush1.msra.mxu0 0.0
  %345 = vmatprep.subr.mxu0 0.0
  %346 = vmatpush1.msra.mxu0 0.0
  %347 = vmatprep.subr.mxu0 0.0
  %348 = vmatpush1.msra.mxu0 0.0
  %349 = vmatprep.subr.mxu0 0.0
  %350 = vmatpush1.msra.mxu0 0.0
  %351 = vmatprep.subr.mxu0 0.0
  %352 = vmatpush1.msra.mxu0 0.0
  %353 = vmatprep.subr.mxu0 0.0
  %354 = vmatpush1.msra.mxu0 0.0
  %355 = vmatprep.subr.mxu0 0.0
  %356 = vmatpush1.msra.mxu0 0.0
  %357 = vmatprep.subr.mxu0 0.0
  %358 = vmatpush1.msra.mxu0 0.0
  %359 = vmatprep.subr.mxu0 0.0
  %360 = vmatpush1.msra.mxu0 0.0
  %361 = vmatprep.subr.mxu0 0.0
  %362 = vmatpush1.msra.mxu0 0.0
  %363 = vmatprep.subr.mxu0 0.0
  %364 = vmatpush1.msra.mxu0 0.0
  %365 = vmatprep.subr.mxu0 0.0
  %366 = vmatpush1.msra.mxu0 0.0
  %367 = vmatprep.subr.mxu0 0.0
  %368 = vmatpush1.msra.mxu0 0.0
  %369 = vmatprep.subr.mxu0 0.0
  %370 = vmatpush1.msra.mxu0 0.0
  %371 = vmatprep.subr.mxu0 0.0
  %372 = vmatpush1.msra.mxu0 0.0
  %373 = vmatprep.subr.mxu0 0.0
  %374 = vmatpush1.msra.mxu0 0.0
  %375 = vmatprep.subr.mxu0 0.0
  %376 = vmatpush1.msra.mxu0 0.0
  %377 = vmatprep.subr.mxu0 0.0
  %378 = vmatpush1.msra.mxu0 0.0
  %379 = vmatprep.subr.mxu0 0.0
  %380 = vmatpush1.msra.mxu0 0.0
  %381 = vmatprep.subr.mxu0 0.0
  %382 = vmatpush1.msra.mxu0 0.0
  %383 = vmatprep.subr.mxu0 0.0
  %384 = vmatpush1.msra.mxu0 0.0
  %385 = vmatprep.subr.mxu0 0.0
  %386 = vmatpush1.msra.mxu0 0.0
  %387 = vmatprep.subr.mxu0 0.0
  %388 = vmatpush1.msra.mxu0 0.0
  %389 = vmatprep.subr.mxu0 0.0
  %390 = vmatpush1.msra.mxu0 0.0
  %391 = vmatprep.subr.mxu0 0.0
  %392 = vmatpush1.msra.mxu0 0.0
  %393 = vmatprep.subr.mxu0 0.0
  %394 = vmatpush1.msra.mxu0 0.0
  %395 = vmatprep.subr.mxu0 0.0
  %396 = vmatpush1.msra.mxu0 0.0
  %397 = vmatprep.subr.mxu0 0.0
  %398 = vmatpush1.msra.mxu0 0.0
  %399 = vmatprep.mubr.f32.mxu0 0.0
  %400 = vmatmul.mubr.f32.gmra.mrb[0].mxu0 %v333
  %v401 = vpop.f32.mrb[0].mxu0
  %v402 = vadd.f32 0.0, %v401
  %v403 = vpop.f32.mrb[0].mxu0
  %404 = vdwg.mxu0
  %v406 = vrot.slane %v402, 6
  %v408 = vadd.f32 %v109, %v406
  %v409 = vxor.u32 %v408, 2147483648
  %v410 = vmul.f32 %v409, 1.442695
  %v411 = vpow.pop %v410
  %v412 = vadd.f32 %v411, 1.0
  %v413 = vrcp.pop %v412
  %v414 = vmul.f32 1.0, %v413
  %v415 = vtanh.pop %v408
  %v417 = vrot.slane %v317, 7
  %v419 = vmul.f32 %v414, %v417
  %421 = vrot.lane.b32.xlu0 %v415, 32
  %v422 = vpop.permute.xlu0 %421
  %v424 = vmul.f32 %v414, %v422
  %426 = vrot.lane.b32.xlu0 %v424, 32
  %v427 = vpop.permute.xlu0 %426
  %v429 = vadd.f32 %v419, %v427
  %v430 = vtanh.pop %v429
  %432 = vrot.lane.b32.xlu0 %v430, 32
  %v433 = vpop.permute.xlu0 %432
  %v435 = vmul.f32 %v414, %v433
  %437 = vrot.lane.b32.xlu0 %v435, 64
  %v438 = vpop.permute.xlu0 %437
  %vm440 = vcmask 256002
  %441 = vst.msk [vmem:[#allocation2] sm:$0x4] %vm440, %v438
  %v442 = vrot.slane %v435, 2
  %443 = vrot.lane.b32.xlu0 %v442, 64
  %v444 = vpop.permute.xlu0 %443
  %v445 = vsel %vm116, %v444, 0
  %447 = vmatprep.subr.mxu0 0.0
  %448 = vmatpush1.msra.mxu0 %v112
  %449 = vmatprep.subr.mxu0 0.0
  %450 = vmatpush1.msra.mxu0 %v113
  %451 = vmatprep.subr.mxu0 0.0
  %452 = vmatpush1.msra.mxu0 %v114
  %453 = vmatprep.subr.mxu0 0.0
  %454 = vmatpush1.msra.mxu0 %v115
  %455 = vmatprep.subr.mxu0 0.0
  %456 = vmatpush1.msra.mxu0 0.0
  %457 = vmatprep.subr.mxu0 0.0
  %458 = vmatpush1.msra.mxu0 0.0
  %459 = vmatprep.subr.mxu0 0.0
  %460 = vmatpush1.msra.mxu0 0.0
  %461 = vmatprep.subr.mxu0 0.0
  %462 = vmatpush1.msra.mxu0 0.0
  %463 = vmatprep.subr.mxu0 0.0
  %464 = vmatpush1.msra.mxu0 0.0
  %465 = vmatprep.subr.mxu0 0.0
  %466 = vmatpush1.msra.mxu0 0.0
  %467 = vmatprep.subr.mxu0 0.0
  %468 = vmatpush1.msra.mxu0 0.0
  %469 = vmatprep.subr.mxu0 0.0
  %470 = vmatpush1.msra.mxu0 0.0
  %471 = vmatprep.subr.mxu0 0.0
  %472 = vmatpush1.msra.mxu0 0.0
  %473 = vmatprep.subr.mxu0 0.0
  %474 = vmatpush1.msra.mxu0 0.0
  %475 = vmatprep.subr.mxu0 0.0
  %476 = vmatpush1.msra.mxu0 0.0
  %477 = vmatprep.subr.mxu0 0.0
  %478 = vmatpush1.msra.mxu0 0.0
  %479 = vmatprep.subr.mxu0 0.0
  %480 = vmatpush1.msra.mxu0 0.0
  %481 = vmatprep.subr.mxu0 0.0
  %482 = vmatpush1.msra.mxu0 0.0
  %483 = vmatprep.subr.mxu0 0.0
  %484 = vmatpush1.msra.mxu0 0.0
  %485 = vmatprep.subr.mxu0 0.0
  %486 = vmatpush1.msra.mxu0 0.0
  %487 = vmatprep.subr.mxu0 0.0
  %488 = vmatpush1.msra.mxu0 0.0
  %489 = vmatprep.subr.mxu0 0.0
  %490 = vmatpush1.msra.mxu0 0.0
  %491 = vmatprep.subr.mxu0 0.0
  %492 = vmatpush1.msra.mxu0 0.0
  %493 = vmatprep.subr.mxu0 0.0
  %494 = vmatpush1.msra.mxu0 0.0
  %495 = vmatprep.subr.mxu0 0.0
  %496 = vmatpush1.msra.mxu0 0.0
  %497 = vmatprep.subr.mxu0 0.0
  %498 = vmatpush1.msra.mxu0 0.0
  %499 = vmatprep.subr.mxu0 0.0
  %500 = vmatpush1.msra.mxu0 0.0
  %501 = vmatprep.subr.mxu0 0.0
  %502 = vmatpush1.msra.mxu0 0.0
  %503 = vmatprep.subr.mxu0 0.0
  %504 = vmatpush1.msra.mxu0 0.0
  %505 = vmatprep.subr.mxu0 0.0
  %506 = vmatpush1.msra.mxu0 0.0
  %507 = vmatprep.subr.mxu0 0.0
  %508 = vmatpush1.msra.mxu0 0.0
  %509 = vmatprep.subr.mxu0 0.0
  %510 = vmatpush1.msra.mxu0 0.0
  %511 = vmatprep.mubr.f32.mxu0 0.0
  %512 = vmatmul.mubr.f32.gmra.mrb[0].mxu0 %v445
  %v513 = vpop.f32.mrb[0].mxu0
  %v514 = vadd.f32 0.0, %v513
  %v515 = vpop.f32.mrb[0].mxu0
  %516 = vdwg.mxu0
  %v518 = vrot.slane %v514, 5
  %v520 = vadd.f32 %v109, %v518
  %v521 = vxor.u32 %v520, 2147483648
  %v522 = vmul.f32 %v521, 1.442695
  %v523 = vpow.pop %v522
  %v524 = vadd.f32 %v523, 1.0
  %v525 = vrcp.pop %v524
  %v526 = vmul.f32 1.0, %v525
  %v527 = vtanh.pop %v520
  %v529 = vrot.slane %v429, 7
  %v531 = vmul.f32 %v526, %v529
  %533 = vrot.lane.b32.xlu0 %v527, 32
  %v534 = vpop.permute.xlu0 %533
  %v536 = vmul.f32 %v526, %v534
  %538 = vrot.lane.b32.xlu0 %v536, 32
  %v539 = vpop.permute.xlu0 %538
  %v541 = vadd.f32 %v531, %v539
  %v542 = vtanh.pop %v541
  %544 = vrot.lane.b32.xlu0 %v542, 32
  %v545 = vpop.permute.xlu0 %544
  %v547 = vmul.f32 %v526, %v545
  %549 = vrot.lane.b32.xlu0 %v547, 64
  %v550 = vpop.permute.xlu0 %549
  %vm552 = vcmask 257027
  %553 = vst.msk [vmem:[#allocation2] sm:$0x8] %vm552, %v550
  %v554 = vrot.slane %v547, 3
  %555 = vrot.lane.b32.xlu0 %v554, 64
  %v556 = vpop.permute.xlu0 %555
  %v557 = vsel %vm116, %v556, 0
  %559 = vmatprep.subr.mxu0 0.0
  %560 = vmatpush1.msra.mxu0 %v112
  %561 = vmatprep.subr.mxu0 0.0
  %562 = vmatpush1.msra.mxu0 %v113
  %563 = vmatprep.subr.mxu0 0.0
  %564 = vmatpush1.msra.mxu0 %v114
  %565 = vmatprep.subr.mxu0 0.0
  %566 = vmatpush1.msra.mxu0 %v115
  %567 = vmatprep.subr.mxu0 0.0
  %568 = vmatpush1.msra.mxu0 0.0
  %569 = vmatprep.subr.mxu0 0.0
  %570 = vmatpush1.msra.mxu0 0.0
  %571 = vmatprep.subr.mxu0 0.0
  %572 = vmatpush1.msra.mxu0 0.0
  %573 = vmatprep.subr.mxu0 0.0
  %574 = vmatpush1.msra.mxu0 0.0
  %575 = vmatprep.subr.mxu0 0.0
  %576 = vmatpush1.msra.mxu0 0.0
  %577 = vmatprep.subr.mxu0 0.0
  %578 = vmatpush1.msra.mxu0 0.0
  %579 = vmatprep.subr.mxu0 0.0
  %580 = vmatpush1.msra.mxu0 0.0
  %581 = vmatprep.subr.mxu0 0.0
  %582 = vmatpush1.msra.mxu0 0.0
  %583 = vmatprep.subr.mxu0 0.0
  %584 = vmatpush1.msra.mxu0 0.0
  %585 = vmatprep.subr.mxu0 0.0
  %586 = vmatpush1.msra.mxu0 0.0
  %587 = vmatprep.subr.mxu0 0.0
  %588 = vmatpush1.msra.mxu0 0.0
  %589 = vmatprep.subr.mxu0 0.0
  %590 = vmatpush1.msra.mxu0 0.0
  %591 = vmatprep.subr.mxu0 0.0
  %592 = vmatpush1.msra.mxu0 0.0
  %593 = vmatprep.subr.mxu0 0.0
  %594 = vmatpush1.msra.mxu0 0.0
  %595 = vmatprep.subr.mxu0 0.0
  %596 = vmatpush1.msra.mxu0 0.0
  %597 = vmatprep.subr.mxu0 0.0
  %598 = vmatpush1.msra.mxu0 0.0
  %599 = vmatprep.subr.mxu0 0.0
  %600 = vmatpush1.msra.mxu0 0.0
  %601 = vmatprep.subr.mxu0 0.0
  %602 = vmatpush1.msra.mxu0 0.0
  %603 = vmatprep.subr.mxu0 0.0
  %604 = vmatpush1.msra.mxu0 0.0
  %605 = vmatprep.subr.mxu0 0.0
  %606 = vmatpush1.msra.mxu0 0.0
  %607 = vmatprep.subr.mxu0 0.0
  %608 = vmatpush1.msra.mxu0 0.0
  %609 = vmatprep.subr.mxu0 0.0
  %610 = vmatpush1.msra.mxu0 0.0
  %611 = vmatprep.subr.mxu0 0.0
  %612 = vmatpush1.msra.mxu0 0.0
  %613 = vmatprep.subr.mxu0 0.0
  %614 = vmatpush1.msra.mxu0 0.0
  %615 = vmatprep.subr.mxu0 0.0
  %616 = vmatpush1.msra.mxu0 0.0
  %617 = vmatprep.subr.mxu0 0.0
  %618 = vmatpush1.msra.mxu0 0.0
  %619 = vmatprep.subr.mxu0 0.0
  %620 = vmatpush1.msra.mxu0 0.0
  %621 = vmatprep.subr.mxu0 0.0
  %622 = vmatpush1.msra.mxu0 0.0
  %623 = vmatprep.mubr.f32.mxu0 0.0
  %624 = vmatmul.mubr.f32.gmra.mrb[0].mxu0 %v557
  %v625 = vpop.f32.mrb[0].mxu0
  %v626 = vadd.f32 0.0, %v625
  %v627 = vpop.f32.mrb[0].mxu0
  %628 = vdwg.mxu0
  %v630 = vrot.slane %v626, 4
  %v632 = vadd.f32 %v109, %v630
  %v633 = vxor.u32 %v632, 2147483648
  %v634 = vmul.f32 %v633, 1.442695
  %v635 = vpow.pop %v634
  %v636 = vadd.f32 %v635, 1.0
  %v637 = vrcp.pop %v636
  %v638 = vmul.f32 1.0, %v637
  %v639 = vtanh.pop %v632
  %v641 = vrot.slane %v541, 7
  %v643 = vmul.f32 %v638, %v641
  %645 = vrot.lane.b32.xlu0 %v639, 32
  %v646 = vpop.permute.xlu0 %645
  %v648 = vmul.f32 %v638, %v646
  %650 = vrot.lane.b32.xlu0 %v648, 32
  %v651 = vpop.permute.xlu0 %650
  %v653 = vadd.f32 %v643, %v651
  %v654 = vtanh.pop %v653
  %656 = vrot.lane.b32.xlu0 %v654, 32
  %v657 = vpop.permute.xlu0 %656
  %v659 = vmul.f32 %v638, %v657
  %661 = vrot.lane.b32.xlu0 %v659, 64
  %v662 = vpop.permute.xlu0 %661
  %vm664 = vcmask 258052
  %665 = vst.msk [vmem:[#allocation2] sm:$0x10] %vm664, %v662
  %v666 = vrot.slane %v659, 4
  %667 = vrot.lane.b32.xlu0 %v666, 64
  %v668 = vpop.permute.xlu0 %667
  %v669 = vsel %vm116, %v668, 0
  %671 = vmatprep.subr.mxu0 0.0
  %672 = vmatpush1.msra.mxu0 %v112
  %673 = vmatprep.subr.mxu0 0.0
  %674 = vmatpush1.msra.mxu0 %v113
  %675 = vmatprep.subr.mxu0 0.0
  %676 = vmatpush1.msra.mxu0 %v114
  %677 = vmatprep.subr.mxu0 0.0
  %678 = vmatpush1.msra.mxu0 %v115
  %679 = vmatprep.subr.mxu0 0.0
  %680 = vmatpush1.msra.mxu0 0.0
  %681 = vmatprep.subr.mxu0 0.0
  %682 = vmatpush1.msra.mxu0 0.0
  %683 = vmatprep.subr.mxu0 0.0
  %684 = vmatpush1.msra.mxu0 0.0
  %685 = vmatprep.subr.mxu0 0.0
  %686 = vmatpush1.msra.mxu0 0.0
  %687 = vmatprep.subr.mxu0 0.0
  %688 = vmatpush1.msra.mxu0 0.0
  %689 = vmatprep.subr.mxu0 0.0
  %690 = vmatpush1.msra.mxu0 0.0
  %691 = vmatprep.subr.mxu0 0.0
  %692 = vmatpush1.msra.mxu0 0.0
  %693 = vmatprep.subr.mxu0 0.0
  %694 = vmatpush1.msra.mxu0 0.0
  %695 = vmatprep.subr.mxu0 0.0
  %696 = vmatpush1.msra.mxu0 0.0
  %697 = vmatprep.subr.mxu0 0.0
  %698 = vmatpush1.msra.mxu0 0.0
  %699 = vmatprep.subr.mxu0 0.0
  %700 = vmatpush1.msra.mxu0 0.0
  %701 = vmatprep.subr.mxu0 0.0
  %702 = vmatpush1.msra.mxu0 0.0
  %703 = vmatprep.subr.mxu0 0.0
  %704 = vmatpush1.msra.mxu0 0.0
  %705 = vmatprep.subr.mxu0 0.0
  %706 = vmatpush1.msra.mxu0 0.0
  %707 = vmatprep.subr.mxu0 0.0
  %708 = vmatpush1.msra.mxu0 0.0
  %709 = vmatprep.subr.mxu0 0.0
  %710 = vmatpush1.msra.mxu0 0.0
  %711 = vmatprep.subr.mxu0 0.0
  %712 = vmatpush1.msra.mxu0 0.0
  %713 = vmatprep.subr.mxu0 0.0
  %714 = vmatpush1.msra.mxu0 0.0
  %715 = vmatprep.subr.mxu0 0.0
  %716 = vmatpush1.msra.mxu0 0.0
  %717 = vmatprep.subr.mxu0 0.0
  %718 = vmatpush1.msra.mxu0 0.0
  %719 = vmatprep.subr.mxu0 0.0
  %720 = vmatpush1.msra.mxu0 0.0
  %721 = vmatprep.subr.mxu0 0.0
  %722 = vmatpush1.msra.mxu0 0.0
  %723 = vmatprep.subr.mxu0 0.0
  %724 = vmatpush1.msra.mxu0 0.0
  %725 = vmatprep.subr.mxu0 0.0
  %726 = vmatpush1.msra.mxu0 0.0
  %727 = vmatprep.subr.mxu0 0.0
  %728 = vmatpush1.msra.mxu0 0.0
  %729 = vmatprep.subr.mxu0 0.0
  %730 = vmatpush1.msra.mxu0 0.0
  %731 = vmatprep.subr.mxu0 0.0
  %732 = vmatpush1.msra.mxu0 0.0
  %733 = vmatprep.subr.mxu0 0.0
  %734 = vmatpush1.msra.mxu0 0.0
  %735 = vmatprep.mubr.f32.mxu0 0.0
  %736 = vmatmul.mubr.f32.gmra.mrb[0].mxu0 %v669
  %v737 = vpop.f32.mrb[0].mxu0
  %v738 = vadd.f32 0.0, %v737
  %v739 = vpop.f32.mrb[0].mxu0
  %740 = vdwg.mxu0
  %v742 = vrot.slane %v738, 3
  %v744 = vadd.f32 %v109, %v742
  %v745 = vxor.u32 %v744, 2147483648
  %v746 = vmul.f32 %v745, 1.442695
  %v747 = vpow.pop %v746
  %v748 = vadd.f32 %v747, 1.0
  %v749 = vrcp.pop %v748
  %v750 = vmul.f32 1.0, %v749
  %v751 = vtanh.pop %v744
  %v753 = vrot.slane %v653, 7
  %v755 = vmul.f32 %v750, %v753
  %757 = vrot.lane.b32.xlu0 %v751, 32
  %v758 = vpop.permute.xlu0 %757
  %v760 = vmul.f32 %v750, %v758
  %762 = vrot.lane.b32.xlu0 %v760, 32
  %v763 = vpop.permute.xlu0 %762
  %v765 = vadd.f32 %v755, %v763
  %v766 = vtanh.pop %v765
  %768 = vrot.lane.b32.xlu0 %v766, 32
  %v769 = vpop.permute.xlu0 %768
  %v771 = vmul.f32 %v750, %v769
  %773 = vrot.lane.b32.xlu0 %v771, 64
  %v774 = vpop.permute.xlu0 %773
  %vm776 = vcmask 259077
  %777 = vst.msk [vmem:[#allocation2] sm:$0x20] %vm776, %v774
  %v778 = vrot.slane %v771, 5
  %779 = vrot.lane.b32.xlu0 %v778, 64
  %v780 = vpop.permute.xlu0 %779
  %v781 = vsel %vm116, %v780, 0
  %783 = vmatprep.subr.mxu0 0.0
  %784 = vmatpush1.msra.mxu0 %v112
  %785 = vmatprep.subr.mxu0 0.0
  %786 = vmatpush1.msra.mxu0 %v113
  %787 = vmatprep.subr.mxu0 0.0
  %788 = vmatpush1.msra.mxu0 %v114
  %789 = vmatprep.subr.mxu0 0.0
  %790 = vmatpush1.msra.mxu0 %v115
  %791 = vmatprep.subr.mxu0 0.0
  %792 = vmatpush1.msra.mxu0 0.0
  %793 = vmatprep.subr.mxu0 0.0
  %794 = vmatpush1.msra.mxu0 0.0
  %795 = vmatprep.subr.mxu0 0.0
  %796 = vmatpush1.msra.mxu0 0.0
  %797 = vmatprep.subr.mxu0 0.0
  %798 = vmatpush1.msra.mxu0 0.0
  %799 = vmatprep.subr.mxu0 0.0
  %800 = vmatpush1.msra.mxu0 0.0
  %801 = vmatprep.subr.mxu0 0.0
  %802 = vmatpush1.msra.mxu0 0.0
  %803 = vmatprep.subr.mxu0 0.0
  %804 = vmatpush1.msra.mxu0 0.0
  %805 = vmatprep.subr.mxu0 0.0
  %806 = vmatpush1.msra.mxu0 0.0
  %807 = vmatprep.subr.mxu0 0.0
  %808 = vmatpush1.msra.mxu0 0.0
  %809 = vmatprep.subr.mxu0 0.0
  %810 = vmatpush1.msra.mxu0 0.0
  %811 = vmatprep.subr.mxu0 0.0
  %812 = vmatpush1.msra.mxu0 0.0
  %813 = vmatprep.subr.mxu0 0.0
  %814 = vmatpush1.msra.mxu0 0.0
  %815 = vmatprep.subr.mxu0 0.0
  %816 = vmatpush1.msra.mxu0 0.0
  %817 = vmatprep.subr.mxu0 0.0
  %818 = vmatpush1.msra.mxu0 0.0
  %819 = vmatprep.subr.mxu0 0.0
  %820 = vmatpush1.msra.mxu0 0.0
  %821 = vmatprep.subr.mxu0 0.0
  %822 = vmatpush1.msra.mxu0 0.0
  %823 = vmatprep.subr.mxu0 0.0
  %824 = vmatpush1.msra.mxu0 0.0
  %825 = vmatprep.subr.mxu0 0.0
  %826 = vmatpush1.msra.mxu0 0.0
  %827 = vmatprep.subr.mxu0 0.0
  %828 = vmatpush1.msra.mxu0 0.0
  %829 = vmatprep.subr.mxu0 0.0
  %830 = vmatpush1.msra.mxu0 0.0
  %831 = vmatprep.subr.mxu0 0.0
  %832 = vmatpush1.msra.mxu0 0.0
  %833 = vmatprep.subr.mxu0 0.0
  %834 = vmatpush1.msra.mxu0 0.0
  %835 = vmatprep.subr.mxu0 0.0
  %836 = vmatpush1.msra.mxu0 0.0
  %837 = vmatprep.subr.mxu0 0.0
  %838 = vmatpush1.msra.mxu0 0.0
  %839 = vmatprep.subr.mxu0 0.0
  %840 = vmatpush1.msra.mxu0 0.0
  %841 = vmatprep.subr.mxu0 0.0
  %842 = vmatpush1.msra.mxu0 0.0
  %843 = vmatprep.subr.mxu0 0.0
  %844 = vmatpush1.msra.mxu0 0.0
  %845 = vmatprep.subr.mxu0 0.0
  %846 = vmatpush1.msra.mxu0 0.0
  %847 = vmatprep.mubr.f32.mxu0 0.0
  %848 = vmatmul.mubr.f32.gmra.mrb[0].mxu0 %v781
  %v849 = vpop.f32.mrb[0].mxu0
  %v850 = vadd.f32 0.0, %v849
  %v851 = vpop.f32.mrb[0].mxu0
  %852 = vdwg.mxu0
  %v854 = vrot.slane %v850, 2
  %v856 = vadd.f32 %v109, %v854
  %v857 = vxor.u32 %v856, 2147483648
  %v858 = vmul.f32 %v857, 1.442695
  %v859 = vpow.pop %v858
  %v860 = vadd.f32 %v859, 1.0
  %v861 = vrcp.pop %v860
  %v862 = vmul.f32 1.0, %v861
  %v863 = vtanh.pop %v856
  %v865 = vrot.slane %v765, 7
  %v867 = vmul.f32 %v862, %v865
  %869 = vrot.lane.b32.xlu0 %v863, 32
  %v870 = vpop.permute.xlu0 %869
  %v872 = vmul.f32 %v862, %v870
  %874 = vrot.lane.b32.xlu0 %v872, 32
  %v875 = vpop.permute.xlu0 %874
  %v877 = vadd.f32 %v867, %v875
  %v878 = vtanh.pop %v877
  %880 = vrot.lane.b32.xlu0 %v878, 32
  %v881 = vpop.permute.xlu0 %880
  %v883 = vmul.f32 %v862, %v881
  %885 = vrot.lane.b32.xlu0 %v883, 64
  %v886 = vpop.permute.xlu0 %885
  %vm888 = vcmask 260102
  %889 = vst.msk [vmem:[#allocation2] sm:$0x40] %vm888, %v886
  %v890 = vrot.slane %v883, 6
  %891 = vrot.lane.b32.xlu0 %v890, 64
  %v892 = vpop.permute.xlu0 %891
  %v893 = vsel %vm116, %v892, 0
  %895 = vmatprep.subr.mxu0 0.0
  %896 = vmatpush1.msra.mxu0 %v112
  %897 = vmatprep.subr.mxu0 0.0
  %898 = vmatpush1.msra.mxu0 %v113
  %899 = vmatprep.subr.mxu0 0.0
  %900 = vmatpush1.msra.mxu0 %v114
  %901 = vmatprep.subr.mxu0 0.0
  %902 = vmatpush1.msra.mxu0 %v115
  %903 = vmatprep.subr.mxu0 0.0
  %904 = vmatpush1.msra.mxu0 0.0
  %905 = vmatprep.subr.mxu0 0.0
  %906 = vmatpush1.msra.mxu0 0.0
  %907 = vmatprep.subr.mxu0 0.0
  %908 = vmatpush1.msra.mxu0 0.0
  %909 = vmatprep.subr.mxu0 0.0
  %910 = vmatpush1.msra.mxu0 0.0
  %911 = vmatprep.subr.mxu0 0.0
  %912 = vmatpush1.msra.mxu0 0.0
  %913 = vmatprep.subr.mxu0 0.0
  %914 = vmatpush1.msra.mxu0 0.0
  %915 = vmatprep.subr.mxu0 0.0
  %916 = vmatpush1.msra.mxu0 0.0
  %917 = vmatprep.subr.mxu0 0.0
  %918 = vmatpush1.msra.mxu0 0.0
  %919 = vmatprep.subr.mxu0 0.0
  %920 = vmatpush1.msra.mxu0 0.0
  %921 = vmatprep.subr.mxu0 0.0
  %922 = vmatpush1.msra.mxu0 0.0
  %923 = vmatprep.subr.mxu0 0.0
  %924 = vmatpush1.msra.mxu0 0.0
  %925 = vmatprep.subr.mxu0 0.0
  %926 = vmatpush1.msra.mxu0 0.0
  %927 = vmatprep.subr.mxu0 0.0
  %928 = vmatpush1.msra.mxu0 0.0
  %929 = vmatprep.subr.mxu0 0.0
  %930 = vmatpush1.msra.mxu0 0.0
  %931 = vmatprep.subr.mxu0 0.0
  %932 = vmatpush1.msra.mxu0 0.0
  %933 = vmatprep.subr.mxu0 0.0
  %934 = vmatpush1.msra.mxu0 0.0
  %935 = vmatprep.subr.mxu0 0.0
  %936 = vmatpush1.msra.mxu0 0.0
  %937 = vmatprep.subr.mxu0 0.0
  %938 = vmatpush1.msra.mxu0 0.0
  %939 = vmatprep.subr.mxu0 0.0
  %940 = vmatpush1.msra.mxu0 0.0
  %941 = vmatprep.subr.mxu0 0.0
  %942 = vmatpush1.msra.mxu0 0.0
  %943 = vmatprep.subr.mxu0 0.0
  %944 = vmatpush1.msra.mxu0 0.0
  %945 = vmatprep.subr.mxu0 0.0
  %946 = vmatpush1.msra.mxu0 0.0
  %947 = vmatprep.subr.mxu0 0.0
  %948 = vmatpush1.msra.mxu0 0.0
  %949 = vmatprep.subr.mxu0 0.0
  %950 = vmatpush1.msra.mxu0 0.0
  %951 = vmatprep.subr.mxu0 0.0
  %952 = vmatpush1.msra.mxu0 0.0
  %953 = vmatprep.subr.mxu0 0.0
  %954 = vmatpush1.msra.mxu0 0.0
  %955 = vmatprep.subr.mxu0 0.0
  %956 = vmatpush1.msra.mxu0 0.0
  %957 = vmatprep.subr.mxu0 0.0
  %958 = vmatpush1.msra.mxu0 0.0
  %959 = vmatprep.mubr.f32.mxu0 0.0
  %960 = vmatmul.mubr.f32.gmra.mrb[0].mxu0 %v893
  %v961 = vpop.f32.mrb[0].mxu0
  %v962 = vadd.f32 0.0, %v961
  %v963 = vpop.f32.mrb[0].mxu0
  %964 = vdwg.mxu0
  %v966 = vrot.slane %v962, 1
  %v968 = vadd.f32 %v109, %v966
  %v969 = vxor.u32 %v968, 2147483648
  %v970 = vmul.f32 %v969, 1.442695
  %v971 = vpow.pop %v970
  %v972 = vadd.f32 %v971, 1.0
  %v973 = vrcp.pop %v972
  %v974 = vmul.f32 1.0, %v973
  %v975 = vtanh.pop %v968
  %v977 = vrot.slane %v877, 7
  %v979 = vmul.f32 %v974, %v977
  %981 = vrot.lane.b32.xlu0 %v975, 32
  %v982 = vpop.permute.xlu0 %981
  %v984 = vmul.f32 %v974, %v982
  %986 = vrot.lane.b32.xlu0 %v984, 32
  %v987 = vpop.permute.xlu0 %986
  %v989 = vadd.f32 %v979, %v987
  %v990 = vtanh.pop %v989
  %992 = vrot.lane.b32.xlu0 %v990, 32
  %v993 = vpop.permute.xlu0 %992
  %v995 = vmul.f32 %v974, %v993
  %997 = vrot.lane.b32.xlu0 %v995, 64
  %v998 = vpop.permute.xlu0 %997
  %vm1000 = vcmask 261127
  %1001 = vst.msk [vmem:[#allocation2] sm:$0x80] %vm1000, %v998
  %v1002 = vld [vmem:[#allocation2] sm:$0xff]
  %v1003 = vld [vmem:[%s4] sm:$0xff]
  %v1004 = vld [vmem:[%s4 + $0x8] sm:$0xff]
  %v1005 = vld [vmem:[%s4 + $0x10] sm:$0xff]
  %v1006 = vld [vmem:[%s4 + $0x18] sm:$0xff]
  %v1007 = vld [vmem:[#allocation3] sm:$0x1]
  %v1009 = vlaneseq
  %v1010 = vshrl.u32 %v1009, 7
  %v1011 = vsub.s32 0, %v1010
  %v1012 = vrot.slane %v1007, %v1011
  %v1015 = vsel %vm116, %v1002, 0
  %1017 = vmatprep.subr.mxu0 0.0
  %1018 = vmatpush1.msra.mxu0 %v1003
  %1019 = vmatprep.subr.mxu0 0.0
  %1020 = vmatpush1.msra.mxu0 %v1004
  %1021 = vmatprep.subr.mxu0 0.0
  %1022 = vmatpush1.msra.mxu0 %v1005
  %1023 = vmatprep.subr.mxu0 0.0
  %1024 = vmatpush1.msra.mxu0 %v1006
  %1025 = vmatprep.subr.mxu0 0.0
  %1026 = vmatpush1.msra.mxu0 0.0
  %1027 = vmatprep.subr.mxu0 0.0
  %1028 = vmatpush1.msra.mxu0 0.0
  %1029 = vmatprep.subr.mxu0 0.0
  %1030 = vmatpush1.msra.mxu0 0.0
  %1031 = vmatprep.subr.mxu0 0.0
  %1032 = vmatpush1.msra.mxu0 0.0
  %1033 = vmatprep.subr.mxu0 0.0
  %1034 = vmatpush1.msra.mxu0 0.0
  %1035 = vmatprep.subr.mxu0 0.0
  %1036 = vmatpush1.msra.mxu0 0.0
  %1037 = vmatprep.subr.mxu0 0.0
  %1038 = vmatpush1.msra.mxu0 0.0
  %1039 = vmatprep.subr.mxu0 0.0
  %1040 = vmatpush1.msra.mxu0 0.0
  %1041 = vmatprep.subr.mxu0 0.0
  %1042 = vmatpush1.msra.mxu0 0.0
  %1043 = vmatprep.subr.mxu0 0.0
  %1044 = vmatpush1.msra.mxu0 0.0
  %1045 = vmatprep.subr.mxu0 0.0
  %1046 = vmatpush1.msra.mxu0 0.0
  %1047 = vmatprep.subr.mxu0 0.0
  %1048 = vmatpush1.msra.mxu0 0.0
  %1049 = vmatprep.subr.mxu0 0.0
  %1050 = vmatpush1.msra.mxu0 0.0
  %1051 = vmatprep.subr.mxu0 0.0
  %1052 = vmatpush1.msra.mxu0 0.0
  %1053 = vmatprep.subr.mxu0 0.0
  %1054 = vmatpush1.msra.mxu0 0.0
  %1055 = vmatprep.subr.mxu0 0.0
  %1056 = vmatpush1.msra.mxu0 0.0
  %1057 = vmatprep.subr.mxu0 0.0
  %1058 = vmatpush1.msra.mxu0 0.0
  %1059 = vmatprep.subr.mxu0 0.0
  %1060 = vmatpush1.msra.mxu0 0.0
  %1061 = vmatprep.subr.mxu0 0.0
  %1062 = vmatpush1.msra.mxu0 0.0
  %1063 = vmatprep.subr.mxu0 0.0
  %1064 = vmatpush1.msra.mxu0 0.0
  %1065 = vmatprep.subr.mxu0 0.0
  %1066 = vmatpush1.msra.mxu0 0.0
  %1067 = vmatprep.subr.mxu0 0.0
  %1068 = vmatpush1.msra.mxu0 0.0
  %1069 = vmatprep.subr.mxu0 0.0
  %1070 = vmatpush1.msra.mxu0 0.0
  %1071 = vmatprep.subr.mxu0 0.0
  %1072 = vmatpush1.msra.mxu0 0.0
  %1073 = vmatprep.subr.mxu0 0.0
  %1074 = vmatpush1.msra.mxu0 0.0
  %1075 = vmatprep.subr.mxu0 0.0
  %1076 = vmatpush1.msra.mxu0 0.0
  %1077 = vmatprep.subr.mxu0 0.0
  %1078 = vmatpush1.msra.mxu0 0.0
  %1079 = vmatprep.subr.mxu0 0.0
  %1080 = vmatpush1.msra.mxu0 0.0
  %1081 = vmatprep.mubr.f32.mxu0 0.0
  %1082 = vmatmul.mubr.f32.gmra.mrb[0].mxu0 %v1015
  %v1083 = vpop.f32.mrb[0].mxu0
  %v1084 = vadd.f32 %v1012, %v1083
  %v1085 = vpop.f32.mrb[0].mxu0
  %1086 = vdwg.mxu0
  %vm1087 = vcmask 7168
  %1088 = vst.msk [vmem:[%s6] sm:$0xff] %vm1087, %v1084
  // Predicated region
  $region26: #{tpu_custom_call.1} parent=0 // pred_check
    _
  $region27: #{tpu_custom_call.1} parent=0 // pred_check_branch
    %1090 = sbr.rel (0) target = $region29
  $region28: #{tpu_custom_call.1} parent=0 // pred_region
    _
  $region29: #{tpu_custom_call.1} parent=0 // pred_fallthru
    _
  // Predicated region
  $region30: #{tpu_custom_call.1} parent=0 // pred_check
    _
  $region31: #{tpu_custom_call.1} parent=0 // pred_check_branch
    %1092 = sbr.rel (0) target = $region33
  $region32: #{tpu_custom_call.1} parent=0 // pred_region
    _
  $region33: #{tpu_custom_call.1} parent=0 // pred_fallthru
    _

</llo_original>
